<compile_context>
chip_gen: v7x
topology: tpu7x:2x2x1
jax: 0.10.0
libtpu: 0.0.40
codegen_flags: <defaults>
</compile_context>

<pallas_src>
import functools

import jax
import jax.numpy as jnp
from jax.experimental import pallas as pl
from jax.experimental.pallas import tpu as pltpu


def _rup8(n):
    return -(-int(n) // 8) * 8


def _densenet_kernel(*refs, nn_dims):
    """refs = (x_ref, w_refs..., b_refs..., o_ref).

    x_ref : (rup8(d_in), tm)  feature-major input tile (zero-padded rows).
    w_refs[i] : (n_{i+1}, K_pad_i) transposed+padded weight, except the last
                layer when d_out == 1, which is kept as (K_pad, 1) for the
                VPU-reduce path.
    b_refs[i] : (n_{i+1}, 1)
    o_ref : (d_out, tm)
    """
    nn_dims = tuple(nn_dims)
    L = len(nn_dims) - 1
    d_out = nn_dims[-1]
    reduce_last = d_out == 1

    x_ref = refs[0]
    w_refs = refs[1:1 + L]
    b_refs = refs[1 + L:1 + 2 * L]
    o_ref = refs[-1]

    # Feature-major activations: (K_pad, tm), batch on the lane axis. f32.
    h = x_ref[...]
    tm = h.shape[1]

    for i in range(L):
        w = w_refs[i][...]
        b = b_refs[i][...]                                  # (n_out, 1)
        if i == L - 1 and reduce_last:
            # d_out == 1: broadcast-multiply + sublane reduce (XLU) instead of
            # a 1-row MXU push.  Padded rows of w are zero.
            z = jnp.sum(h * w, axis=0, keepdims=True) + b   # (1, tm)
        else:
            # (n_out, K_pad) @ (K_pad, tm) -> (n_out, tm); N = tm fills the MXU.
            z = jnp.dot(w, h, preferred_element_type=jnp.float32) + b

        if i < L - 1:
            f = jnp.maximum(z, 0.0)                         # sigma = relu
            f = f * f                                       # sigma(z)**2
            n = nn_dims[i + 1]
            pad = _rup8(n) - n
            if pad:
                f = jnp.concatenate(
                    [f, jnp.zeros((pad, tm), f.dtype)], axis=0)
            # Tile-aligned sublane concat (all pieces are multiples of 8 rows).
            h = jnp.concatenate([h, f], axis=0)
        else:
            o_ref[...] = z.astype(o_ref.dtype)


def densenet_forward(x, weights, biases, *, nn_dims, tile_m=8192):
    """x: (batch, d_in) f32.
    weights[i]: (sum(nn_dims[:i+1]), nn_dims[i+1]) f32 (as in the PyTorch module).
    biases[i]:  (nn_dims[i+1],) f32.
    Returns (batch, d_out) f32.
    """
    nn_dims = tuple(int(d) for d in nn_dims)
    L = len(nn_dims) - 1
    batch, d_in = x.shape
    assert d_in == nn_dims[0]
    d_out = nn_dims[-1]
    reduce_last = d_out == 1

    # ---- feature-slot layout (slot j = concat piece j, padded to 8 rows) ---
    slot_pad = [_rup8(nn_dims[j]) for j in range(L)]
    slot_off = [0] * L
    for j in range(1, L):
        slot_off[j] = slot_off[j - 1] + slot_pad[j - 1]
    k_total = slot_off[-1] + slot_pad[-1]

    # ---- pad + transpose weights to match the feature-major buffer ---------
    w_prep, b_prep = [], []
    for i, (w, b) in enumerate(zip(weights, biases)):
        w = jnp.asarray(w, jnp.float32)
        k_pad_i = slot_off[i] + slot_pad[i]
        w_pad = jnp.zeros((k_pad_i, nn_dims[i + 1]), jnp.float32)
        off = 0
        for j in range(i + 1):
            rows = nn_dims[j]
            w_pad = w_pad.at[slot_off[j]:slot_off[j] + rows, :].set(
                w[off:off + rows, :])
            off += rows
        if i == L - 1 and reduce_last:
            w_prep.append(w_pad)                 # (K_pad, 1) for VPU-reduce
        else:
            w_prep.append(w_pad.T)               # (n_out, K_pad)
        b_prep.append(jnp.asarray(b, jnp.float32).reshape(-1, 1))

    # Feature-major, zero-padded input: (rup8(d_in), batch).
    x_t = jnp.zeros((slot_pad[0], batch), jnp.float32).at[:d_in, :].set(
        jnp.asarray(x, jnp.float32).T)

    # ---- batch tile ---------------------------------------------------------
    # Per-grid-step overhead ~0.35us, so make tiles big; cap from a footprint
    # estimate against the actual chip's VMEM (v7x has 64 MiB vs 128 MiB).
    try:
        vmem_cap = int(pltpu.get_tpu_info().vmem_capacity_bytes)
    except Exception:
        vmem_cap = 64 * 1024 * 1024
    vmem_limit = min(int(vmem_cap * 0.75), 112 * 1024 * 1024)

    param_bytes = (sum(4 * w.size for w in w_prep)
                   + sum(4 * b.size for b in b_prep))
    # f32 bytes per batch row: double-buffered x/out tiles + h/z temporaries.
    per_row = 4 * (2 * slot_pad[0] + 2 * d_out + 3 * k_total
                   + 2 * max(nn_dims[1:]))
    tm_cap = max(128,
                 ((vmem_limit // 2 - 2 * param_bytes) // per_row) // 128 * 128)

    tm = min(batch, int(tile_m), tm_cap)
    if tm < batch:
        tm = max(tm // 128 * 128, 128)           # lane-aligned tiles
        if tm >= batch:
            tm = batch
    # Give v7x's two TensorCores something to shard across for big batches.
    if tm == batch and batch >= 4096 and (batch // 2) % 128 == 0:
        tm = batch // 2
    grid = (pl.cdiv(batch, tm),)

    x_spec = pl.BlockSpec((slot_pad[0], tm), lambda i: (0, i),
                          memory_space=pltpu.VMEM)
    out_spec = pl.BlockSpec((d_out, tm), lambda i: (0, i),
                            memory_space=pltpu.VMEM)

    def const_spec(a):
        # Full-array block, constant index_map -> fetched once, VMEM-resident.
        return pl.BlockSpec(a.shape, lambda i: (0, 0),
                            memory_space=pltpu.VMEM)

    kernel = functools.partial(_densenet_kernel, nn_dims=nn_dims)

    flops = 2 * batch * sum(sum(nn_dims[:i + 1]) * nn_dims[i + 1]
                            for i in range(L))
    bytes_accessed = 4 * batch * (slot_pad[0] + d_out) + param_bytes
    cost = pl.CostEstimate(flops=flops, transcendentals=0,
                           bytes_accessed=bytes_accessed)

    out_t = pl.pallas_call(
        kernel,
        out_shape=jax.ShapeDtypeStruct((d_out, batch), jnp.float32),
        grid=grid,
        in_specs=([x_spec]
                  + [const_spec(w) for w in w_prep]
                  + [const_spec(b) for b in b_prep]),
        out_specs=out_spec,
        compiler_params=pltpu.CompilerParams(
            dimension_semantics=("parallel",),
            vmem_limit_bytes=vmem_limit),
        cost_estimate=cost,
    )(x_t, *w_prep, *b_prep)

    return out_t.T                               # (batch, d_out)


def _reference(x, weights, biases, nn_dims):
    L = len(nn_dims) - 1
    h = x
    for i in range(L):
        z = h @ weights[i] + biases[i]
        if i < L - 1:
            a = jnp.maximum(z, 0.0) ** 2
            h = jnp.concatenate([h, a], axis=1)
        else:
            h = z
    return h


if __name__ == "__main__":
    # eqn.dim = 3 -> d_in = 4; int_layers = [32, 32]; d_out = 1.
    dim = 3
    d_in = dim + 1
    int_layers = [32, 32]
    d_out = 1
    nn_dims = [d_in] + int_layers + [d_out]
    L = len(nn_dims) - 1
    batch = 256

    key = jax.random.PRNGKey(0)
    keys = jax.random.split(key, 2 * L + 1)

    weights, biases = [], []
    for i in range(L):
        fan_in = sum(nn_dims[:i + 1])
        w = 0.1 * jax.random.normal(keys[2 * i], (fan_in, nn_dims[i + 1]),
                                    dtype=jnp.float32)
        b = 0.01 * jax.random.normal(keys[2 * i + 1], (nn_dims[i + 1],),
                                     dtype=jnp.float32)
        weights.append(w)
        biases.append(b)

    x = jax.random.normal(keys[-1], (batch, d_in), dtype=jnp.float32)
    ref = _reference(x, weights, biases, nn_dims)

    # Single-tile run (default large tile_m -> one grid step).
    out = densenet_forward(x, weights, biases, nn_dims=nn_dims)
    out = jax.block_until_ready(out)
    assert out.shape == (batch, d_out), out.shape
    err = jnp.max(jnp.abs(out - ref))
    assert jnp.allclose(out, ref, atol=1e-4, rtol=1e-4), f"max abs err {err}"

    # Tiled run (2 grid steps, exercises the batch-tiling / lane-aligned path).
    out2 = densenet_forward(x, weights, biases, nn_dims=nn_dims, tile_m=128)
    out2 = jax.block_until_ready(out2)
    err2 = jnp.max(jnp.abs(out2 - ref))
    assert jnp.allclose(out2, ref, atol=1e-4, rtol=1e-4), f"max abs err {err2}"

    print("KERNEL_OK")
</pallas_src>

<mosaic_0001>
module attributes {stable_mosaic.version = 11 : i64} {
  func.func @_densenet_kernel(%arg0: i32, %arg1: memref<8x256xf32, #tpu.memory_space<vmem>>, %arg2: memref<32x8xf32, #tpu.memory_space<vmem>>, %arg3: memref<32x40xf32, #tpu.memory_space<vmem>>, %arg4: memref<72x1xf32, #tpu.memory_space<vmem>>, %arg5: memref<32x1xf32, #tpu.memory_space<vmem>>, %arg6: memref<32x1xf32, #tpu.memory_space<vmem>>, %arg7: memref<1x1xf32, #tpu.memory_space<vmem>>, %arg8: memref<1x256xf32, #tpu.memory_space<vmem>>) attributes {dimension_semantics = [#tpu.dimension_semantics<parallel>], iteration_bounds = array<i64: 1>, scalar_prefetch = 0 : i64, scratch_operands = 0 : i64, tpu.core_type = #tpu.core_type<tc>, window_params = [{transform_indices = @transform_0, window_bounds = array<i64: 8, 256>}, {pipeline_mode = #tpu.pipeline_mode<synchronous>, transform_indices = @transform_1, window_bounds = array<i64: 32, 8>}, {pipeline_mode = #tpu.pipeline_mode<synchronous>, transform_indices = @transform_2, window_bounds = array<i64: 32, 40>}, {pipeline_mode = #tpu.pipeline_mode<synchronous>, transform_indices = @transform_3, window_bounds = array<i64: 72, 1>}, {pipeline_mode = #tpu.pipeline_mode<synchronous>, transform_indices = @transform_4, window_bounds = array<i64: 32, 1>}, {pipeline_mode = #tpu.pipeline_mode<synchronous>, transform_indices = @transform_5, window_bounds = array<i64: 32, 1>}, {pipeline_mode = #tpu.pipeline_mode<synchronous>, transform_indices = @transform_6, window_bounds = array<i64: 1, 1>}, {transform_indices = @transform_7, window_bounds = array<i64: 1, 256>}]} {
    %c0 = arith.constant 0 : index
    %c0_0 = arith.constant 0 : index
    %0 = vector.load %arg1[%c0, %c0_0] : memref<8x256xf32, #tpu.memory_space<vmem>>, vector<8x256xf32>
    %c0_1 = arith.constant 0 : index
    %c0_2 = arith.constant 0 : index
    %1 = vector.load %arg2[%c0_1, %c0_2] : memref<32x8xf32, #tpu.memory_space<vmem>>, vector<32x8xf32>
    %c0_3 = arith.constant 0 : index
    %c0_4 = arith.constant 0 : index
    %2 = vector.load %arg5[%c0_3, %c0_4] : memref<32x1xf32, #tpu.memory_space<vmem>>, vector<32x1xf32>
    %cst = arith.constant dense<0.000000e+00> : vector<32x256xf32>
    %3 = tpu.matmul %1, %0, %cst {dimension_numbers = #tpu.dot_dimension_numbers<[1], [0], [0], [1], [0, 0, 1, 1], [], []>} : vector<32x8xf32>, vector<8x256xf32>, vector<32x256xf32> -> vector<32x256xf32>
    %4 = vector.broadcast %2 : vector<32x1xf32> to vector<32x256xf32>
    %5 = arith.addf %3, %4 : vector<32x256xf32>
    %cst_5 = arith.constant 0.000000e+00 : f32
    %6 = vector.broadcast %cst_5 : f32 to vector<32x256xf32>
    %7 = arith.maximumf %5, %6 : vector<32x256xf32>
    %8 = arith.mulf %7, %7 : vector<32x256xf32>
    %9 = tpu.concatenate %0, %8 in 0 : vector<8x256xf32>, vector<32x256xf32> -> vector<40x256xf32>
    %c0_6 = arith.constant 0 : index
    %c0_7 = arith.constant 0 : index
    %10 = vector.load %arg3[%c0_6, %c0_7] : memref<32x40xf32, #tpu.memory_space<vmem>>, vector<32x40xf32>
    %c0_8 = arith.constant 0 : index
    %c0_9 = arith.constant 0 : index
    %11 = vector.load %arg6[%c0_8, %c0_9] : memref<32x1xf32, #tpu.memory_space<vmem>>, vector<32x1xf32>
    %cst_10 = arith.constant dense<0.000000e+00> : vector<32x256xf32>
    %12 = tpu.matmul %10, %9, %cst_10 {dimension_numbers = #tpu.dot_dimension_numbers<[1], [0], [0], [1], [0, 0, 1, 1], [], []>} : vector<32x40xf32>, vector<40x256xf32>, vector<32x256xf32> -> vector<32x256xf32>
    %13 = vector.broadcast %11 : vector<32x1xf32> to vector<32x256xf32>
    %14 = arith.addf %12, %13 : vector<32x256xf32>
    %cst_11 = arith.constant 0.000000e+00 : f32
    %15 = vector.broadcast %cst_11 : f32 to vector<32x256xf32>
    %16 = arith.maximumf %14, %15 : vector<32x256xf32>
    %17 = arith.mulf %16, %16 : vector<32x256xf32>
    %18 = tpu.concatenate %9, %17 in 0 : vector<40x256xf32>, vector<32x256xf32> -> vector<72x256xf32>
    %c0_12 = arith.constant 0 : index
    %c0_13 = arith.constant 0 : index
    %19 = vector.load %arg4[%c0_12, %c0_13] : memref<72x1xf32, #tpu.memory_space<vmem>>, vector<72x1xf32>
    %c0_14 = arith.constant 0 : index
    %c0_15 = arith.constant 0 : index
    %20 = vector.load %arg7[%c0_14, %c0_15] : memref<1x1xf32, #tpu.memory_space<vmem>>, vector<1x1xf32>
    %21 = vector.broadcast %19 : vector<72x1xf32> to vector<72x256xf32>
    %22 = arith.mulf %18, %21 : vector<72x256xf32>
    %cst_16 = arith.constant dense<0.000000e+00> : vector<256xf32>
    %23 = vector.multi_reduction <add>, %22, %cst_16 [0] : vector<72x256xf32> to vector<256xf32>
    %24 = vector.shape_cast %23 : vector<256xf32> to vector<1x256xf32>
    %25 = vector.broadcast %20 : vector<1x1xf32> to vector<1x256xf32>
    %26 = arith.addf %24, %25 : vector<1x256xf32>
    %c0_17 = arith.constant 0 : index
    %c0_18 = arith.constant 0 : index
    %27 = vector.load %arg8[%c0_17, %c0_18] : memref<1x256xf32, #tpu.memory_space<vmem>>, vector<1x256xf32>
    tpu.vector_store %arg8[%c0_17, %c0_18], %26 {strides = array<i32>} : memref<1x256xf32, #tpu.memory_space<vmem>>, vector<1x256xf32>,
    return
  }
  func.func @transform_0(%arg0: i32) -> (i32, i32) {
    %c0_i32 = arith.constant 0 : i32
    %c0_i32_0 = arith.constant 0 : i32
    return %c0_i32, %arg0 : i32, i32
  }
  func.func @transform_1(%arg0: i32) -> (i32, i32) {
    %c0_i32 = arith.constant 0 : i32
    %c0_i32_0 = arith.constant 0 : i32
    %c0_i32_1 = arith.constant 0 : i32
    return %c0_i32, %c0_i32_0 : i32, i32
  }
  func.func @transform_2(%arg0: i32) -> (i32, i32) {
    %c0_i32 = arith.constant 0 : i32
    %c0_i32_0 = arith.constant 0 : i32
    %c0_i32_1 = arith.constant 0 : i32
    return %c0_i32, %c0_i32_0 : i32, i32
  }
  func.func @transform_3(%arg0: i32) -> (i32, i32) {
    %c0_i32 = arith.constant 0 : i32
    %c0_i32_0 = arith.constant 0 : i32
    %c0_i32_1 = arith.constant 0 : i32
    return %c0_i32, %c0_i32_0 : i32, i32
  }
  func.func @transform_4(%arg0: i32) -> (i32, i32) {
    %c0_i32 = arith.constant 0 : i32
    %c0_i32_0 = arith.constant 0 : i32
    %c0_i32_1 = arith.constant 0 : i32
    return %c0_i32, %c0_i32_0 : i32, i32
  }
  func.func @transform_5(%arg0: i32) -> (i32, i32) {
    %c0_i32 = arith.constant 0 : i32
    %c0_i32_0 = arith.constant 0 : i32
    %c0_i32_1 = arith.constant 0 : i32
    return %c0_i32, %c0_i32_0 : i32, i32
  }
  func.func @transform_6(%arg0: i32) -> (i32, i32) {
    %c0_i32 = arith.constant 0 : i32
    %c0_i32_0 = arith.constant 0 : i32
    %c0_i32_1 = arith.constant 0 : i32
    return %c0_i32, %c0_i32_0 : i32, i32
  }
  func.func @transform_7(%arg0: i32) -> (i32, i32) {
    %c0_i32 = arith.constant 0 : i32
    %c0_i32_0 = arith.constant 0 : i32
    return %c0_i32, %arg0 : i32, i32
  }
}

</mosaic_0001>

<llo_original>
// kernel: tpu_custom_call.1
$region0: #{tpu_custom_call.1}
  #allocation0 [shape = 'u32[]', space=smem, size = 0x4, offset = 0x4, fixed_abs, tag = 'smem constant byte address 0x4 - core index']
  #allocation1 [shape = 'u32[144,128]{1,0:T(1,128)}', space=vmem, size = 0x12000, scoped, tag = 'internal scratch']
  #allocation2 [shape = 'f32[1,1]{1,0:T(1,128)S(1)}', space=vmem, size = 0x200, scoped, tag = 'scoped memory for tpu_custom_call.1']
  %s0 = inlined_call_operand.vmem [shape: f32[8,256], index: 0, kind: input, shape index: {}]
  %s1 = inlined_call_operand.vmem [shape: f32[32,8], index: 1, kind: input, shape index: {}]
  %s2 = inlined_call_operand.vmem [shape: f32[32,40], index: 2, kind: input, shape index: {}]
  %s3 = inlined_call_operand.vmem [shape: f32[72,1], index: 3, kind: input, shape index: {}]
  %s4 = inlined_call_operand.vmem [shape: f32[32,1], index: 4, kind: input, shape index: {}]
  %s5 = inlined_call_operand.vmem [shape: f32[32,1], index: 5, kind: input, shape index: {}]
  %s6 = inlined_call_operand.<no memory space> [shape: f32[1,1], index: 6, kind: input, shape index: {}]
  %s7 = inlined_call_operand.hbm [shape: f32[1,256], index: 7, kind: output, shape index: {}]
  %s8 = sld [smem:[#allocation0]]
  $region38: #{tpu_custom_call.1} parent=0
    _
  %s10 = ssub.s32 1, %s8
  %s11 = scalar_select 0, %s10, %s8
  %v12 = vstv %s6
  %13 = vst [vmem:[#allocation2] sm:$0x1] %v12
  $region1: #{tpu_custom_call.1} parent=0
    #allocation3 [shape = 'u8[1024]{0}', space=vmem, size = 0x400, scoped, tag = 'output window, operand 0, single buffered']
    #allocation4 [shape = 's32[1]{0}', space=sflag, size = 0x4, scoped, tag = 'scoped memory for tpu_custom_call.1']
    %14 = vsyncpa [#allocation4], 0
    // Predicated region
    $region2: #{tpu_custom_call.1} parent=1 // pred_check
      _
    $region3: #{tpu_custom_call.1} parent=1 // pred_check_branch
      %16 = sbr.rel (0) target = $region5
    $region4: #{tpu_custom_call.1} parent=1 // pred_region
      _
    $region5: #{tpu_custom_call.1} parent=1 // pred_fallthru
      _
    // Predicated region
    $region6: #{tpu_custom_call.1} parent=1 // pred_check
      _
    $region7: #{tpu_custom_call.1} parent=1 // pred_check_branch
      %18 = sbr.rel (0) target = $region9
    $region8: #{tpu_custom_call.1} parent=1 // pred_region
      _
    $region9: #{tpu_custom_call.1} parent=1 // pred_fallthru
      _
    // Predicated region
    $region10: #{tpu_custom_call.1} parent=1 // pred_check
      _
    $region11: #{tpu_custom_call.1} parent=1 // pred_check_branch
      %20 = sbr.rel (0) target = $region13
    $region12: #{tpu_custom_call.1} parent=1 // pred_region
      _
    $region13: #{tpu_custom_call.1} parent=1 // pred_fallthru
      _
    // Predicated region
    $region14: #{tpu_custom_call.1} parent=1 // pred_check
      _
    $region15: #{tpu_custom_call.1} parent=1 // pred_check_branch
      %22 = sbr.rel (0) target = $region17
    $region16: #{tpu_custom_call.1} parent=1 // pred_region
      _
    $region17: #{tpu_custom_call.1} parent=1 // pred_fallthru
      _
    // Predicated region
    $region18: #{tpu_custom_call.1} parent=1 // pred_check
      _
    $region19: #{tpu_custom_call.1} parent=1 // pred_check_branch
      %24 = sbr.rel (0) target = $region21
    $region20: #{tpu_custom_call.1} parent=1 // pred_region
      _
    $region21: #{tpu_custom_call.1} parent=1 // pred_fallthru
      _
    // Predicated region
    $region22: #{tpu_custom_call.1} parent=1 // pred_check
      _
    $region23: #{tpu_custom_call.1} parent=1 // pred_check_branch
      %26 = sbr.rel (0) target = $region25
    $region24: #{tpu_custom_call.1} parent=1 // pred_region
      _
    $region25: #{tpu_custom_call.1} parent=1 // pred_fallthru
      _
    // Predicated region
    $region26: #{tpu_custom_call.1} parent=1 // pred_check
      _
    $region27: #{tpu_custom_call.1} parent=1 // pred_check_branch
      %28 = sbr.rel (0) target = $region29
    $region28: #{tpu_custom_call.1} parent=1 // pred_region
      _
    $region29: #{tpu_custom_call.1} parent=1 // pred_fallthru
      _
    %v29 = vld [vmem:[%s0] sm:$0xff]
    %v30 = vld [vmem:[%s0 + $0x8] sm:$0xff]
    %v31 = vld [vmem:[%s1] sm:$0xff]
    %v32 = vld [vmem:[%s1 + $0x8] sm:$0xff]
    %v33 = vld [vmem:[%s1 + $0x10] sm:$0xff]
    %v34 = vld [vmem:[%s1 + $0x18] sm:$0xff]
    %v35 = vld [vmem:[%s4] sm:$0xff]
    %v36 = vld [vmem:[%s4 + $0x8] sm:$0xff]
    %v37 = vld [vmem:[%s4 + $0x10] sm:$0xff]
    %v38 = vld [vmem:[%s4 + $0x18] sm:$0xff]
    %40 = vset.pattern.permute.xlu0 0
    %41 = vperm.xlu0 %40, %v35
    %v42 = vpop.permute.xlu0 %41
    %45 = vset.pattern.permute.xlu0 0
    %46 = vperm.xlu0 %45, %v36
    %v47 = vpop.permute.xlu0 %46
    %50 = vset.pattern.permute.xlu0 0
    %51 = vperm.xlu0 %50, %v37
    %v52 = vpop.permute.xlu0 %51
    %55 = vset.pattern.permute.xlu0 0
    %56 = vperm.xlu0 %55, %v38
    %v57 = vpop.permute.xlu0 %56
    %vm59 = vcmask 64512
    %v61 = vsel %vm59, %v31, 0
    %v64 = vsel %vm59, %v32, 0
    %v67 = vsel %vm59, %v33, 0
    %v70 = vsel %vm59, %v34, 0
    %72 = vmatprep.subr.mxu0 %v30
    %73 = vmatpush1.msra.mxu0 %v29
    %74 = vmatprep.subr.mxu0 0.0
    %75 = vmatpush1.msra.mxu0 0.0
    %76 = vmatprep.subr.mxu0 0.0
    %77 = vmatpush1.msra.mxu0 0.0
    %78 = vmatprep.subr.mxu0 0.0
    %79 = vmatpush1.msra.mxu0 0.0
    %80 = vmatprep.subr.mxu0 0.0
    %81 = vmatpush1.msra.mxu0 0.0
    %82 = vmatprep.subr.mxu0 0.0
    %83 = vmatpush1.msra.mxu0 0.0
    %84 = vmatprep.subr.mxu0 0.0
    %85 = vmatpush1.msra.mxu0 0.0
    %86 = vmatprep.subr.mxu0 0.0
    %87 = vmatpush1.msra.mxu0 0.0
    %88 = vmatprep.subr.mxu0 0.0
    %89 = vmatpush1.msra.mxu0 0.0
    %90 = vmatprep.subr.mxu0 0.0
    %91 = vmatpush1.msra.mxu0 0.0
    %92 = vmatprep.subr.mxu0 0.0
    %93 = vmatpush1.msra.mxu0 0.0
    %94 = vmatprep.subr.mxu0 0.0
    %95 = vmatpush1.msra.mxu0 0.0
    %96 = vmatprep.subr.mxu0 0.0
    %97 = vmatpush1.msra.mxu0 0.0
    %98 = vmatprep.subr.mxu0 0.0
    %99 = vmatpush1.msra.mxu0 0.0
    %100 = vmatprep.subr.mxu0 0.0
    %101 = vmatpush1.msra.mxu0 0.0
    %102 = vmatprep.subr.mxu0 0.0
    %103 = vmatpush1.msra.mxu0 0.0
    %104 = vmatprep.subr.mxu0 0.0
    %105 = vmatpush1.msra.mxu0 0.0
    %106 = vmatprep.subr.mxu0 0.0
    %107 = vmatpush1.msra.mxu0 0.0
    %108 = vmatprep.subr.mxu0 0.0
    %109 = vmatpush1.msra.mxu0 0.0
    %110 = vmatprep.subr.mxu0 0.0
    %111 = vmatpush1.msra.mxu0 0.0
    %112 = vmatprep.subr.mxu0 0.0
    %113 = vmatpush1.msra.mxu0 0.0
    %114 = vmatprep.subr.mxu0 0.0
    %115 = vmatpush1.msra.mxu0 0.0
    %116 = vmatprep.subr.mxu0 0.0
    %117 = vmatpush1.msra.mxu0 0.0
    %118 = vmatprep.subr.mxu0 0.0
    %119 = vmatpush1.msra.mxu0 0.0
    %120 = vmatprep.subr.mxu0 0.0
    %121 = vmatpush1.msra.mxu0 0.0
    %122 = vmatprep.subr.mxu0 0.0
    %123 = vmatpush1.msra.mxu0 0.0
    %124 = vmatprep.subr.mxu0 0.0
    %125 = vmatpush1.msra.mxu0 0.0
    %126 = vmatprep.subr.mxu0 0.0
    %127 = vmatpush1.msra.mxu0 0.0
    %128 = vmatprep.subr.mxu0 0.0
    %129 = vmatpush1.msra.mxu0 0.0
    %130 = vmatprep.subr.mxu0 0.0
    %131 = vmatpush1.msra.mxu0 0.0
    %132 = vmatprep.subr.mxu0 0.0
    %133 = vmatpush1.msra.mxu0 0.0
    %134 = vmatprep.subr.mxu0 0.0
    %135 = vmatpush1.msra.mxu0 0.0
    %136 = vmatprep.mubr.f32.mxu0 0.0
    %137 = vmatmul.mubr.f32.gmra.mrb[0].mxu0 %v61
    %v138 = vpop.f32.mrb[0].mxu0
    %v139 = vadd.f32 %v42, %v138
    %v140 = vpop.f32.mrb[0].mxu0
    %v141 = vadd.f32 %v42, %v140
    %142 = vmatprep.mubr.f32.mxu0 0.0
    %143 = vmatmul.mubr.f32.gmra.mrb[0].mxu0 %v64
    %v144 = vpop.f32.mrb[0].mxu0
    %v145 = vadd.f32 %v47, %v144
    %v146 = vpop.f32.mrb[0].mxu0
    %v147 = vadd.f32 %v47, %v146
    %148 = vmatprep.mubr.f32.mxu0 0.0
    %149 = vmatmul.mubr.f32.gmra.mrb[0].mxu0 %v67
    %v150 = vpop.f32.mrb[0].mxu0
    %v151 = vadd.f32 %v52, %v150
    %v152 = vpop.f32.mrb[0].mxu0
    %v153 = vadd.f32 %v52, %v152
    %154 = vmatprep.mubr.f32.mxu0 0.0
    %155 = vmatmul.mubr.f32.gmra.mrb[0].mxu0 %v70
    %v156 = vpop.f32.mrb[0].mxu0
    %v157 = vadd.f32 %v57, %v156
    %v158 = vpop.f32.mrb[0].mxu0
    %v159 = vadd.f32 %v57, %v158
    %160 = vdwg.mxu0
    %v161 = vmax.f32 %v139, 0.0
    %v162 = vmax.f32 %v141, 0.0
    %v163 = vmax.f32 %v145, 0.0
    %v164 = vmax.f32 %v147, 0.0
    %v165 = vmax.f32 %v151, 0.0
    %v166 = vmax.f32 %v153, 0.0
    %v167 = vmax.f32 %v157, 0.0
    %v168 = vmax.f32 %v159, 0.0
    %v169 = vmul.f32 %v161, %v161
    %v170 = vmul.f32 %v162, %v162
    %v171 = vmul.f32 %v163, %v163
    %v172 = vmul.f32 %v164, %v164
    %v173 = vmul.f32 %v165, %v165
    %v174 = vmul.f32 %v166, %v166
    %v175 = vmul.f32 %v167, %v167
    %v176 = vmul.f32 %v168, %v168
    %v177 = vld [vmem:[%s2] sm:$0xff]
    %v178 = vld [vmem:[%s2 + $0x8] sm:$0xff]
    %v179 = vld [vmem:[%s2 + $0x10] sm:$0xff]
    %v180 = vld [vmem:[%s2 + $0x18] sm:$0xff]
    %v181 = vld [vmem:[%s5] sm:$0xff]
    %v182 = vld [vmem:[%s5 + $0x8] sm:$0xff]
    %v183 = vld [vmem:[%s5 + $0x10] sm:$0xff]
    %v184 = vld [vmem:[%s5 + $0x18] sm:$0xff]
    %186 = vset.pattern.permute.xlu0 0
    %187 = vperm.xlu0 %186, %v181
    %v188 = vpop.permute.xlu0 %187
    %191 = vset.pattern.permute.xlu0 0
    %192 = vperm.xlu0 %191, %v182
    %v193 = vpop.permute.xlu0 %192
    %196 = vset.pattern.permute.xlu0 0
    %197 = vperm.xlu0 %196, %v183
    %v198 = vpop.permute.xlu0 %197
    %201 = vset.pattern.permute.xlu0 0
    %202 = vperm.xlu0 %201, %v184
    %v203 = vpop.permute.xlu0 %202
    %vm205 = vcmask 326656
    %v207 = vsel %vm205, %v177, 0
    %v210 = vsel %vm205, %v178, 0
    %v213 = vsel %vm205, %v179, 0
    %v216 = vsel %vm205, %v180, 0
    %218 = vmatprep.subr.mxu0 %v30
    %219 = vmatpush1.msra.mxu0 %v29
    %220 = vmatprep.subr.mxu0 %v170
    %221 = vmatpush1.msra.mxu0 %v169
    %222 = vmatprep.subr.mxu0 %v172
    %223 = vmatpush1.msra.mxu0 %v171
    %224 = vmatprep.subr.mxu0 %v174
    %225 = vmatpush1.msra.mxu0 %v173
    %226 = vmatprep.subr.mxu0 %v176
    %227 = vmatpush1.msra.mxu0 %v175
    %228 = vmatprep.subr.mxu0 0.0
    %229 = vmatpush1.msra.mxu0 0.0
    %230 = vmatprep.subr.mxu0 0.0
    %231 = vmatpush1.msra.mxu0 0.0
    %232 = vmatprep.subr.mxu0 0.0
    %233 = vmatpush1.msra.mxu0 0.0
    %234 = vmatprep.subr.mxu0 0.0
    %235 = vmatpush1.msra.mxu0 0.0
    %236 = vmatprep.subr.mxu0 0.0
    %237 = vmatpush1.msra.mxu0 0.0
    %238 = vmatprep.subr.mxu0 0.0
    %239 = vmatpush1.msra.mxu0 0.0
    %240 = vmatprep.subr.mxu0 0.0
    %241 = vmatpush1.msra.mxu0 0.0
    %242 = vmatprep.subr.mxu0 0.0
    %243 = vmatpush1.msra.mxu0 0.0
    %244 = vmatprep.subr.mxu0 0.0
    %245 = vmatpush1.msra.mxu0 0.0
    %246 = vmatprep.subr.mxu0 0.0
    %247 = vmatpush1.msra.mxu0 0.0
    %248 = vmatprep.subr.mxu0 0.0
    %249 = vmatpush1.msra.mxu0 0.0
    %250 = vmatprep.subr.mxu0 0.0
    %251 = vmatpush1.msra.mxu0 0.0
    %252 = vmatprep.subr.mxu0 0.0
    %253 = vmatpush1.msra.mxu0 0.0
    %254 = vmatprep.subr.mxu0 0.0
    %255 = vmatpush1.msra.mxu0 0.0
    %256 = vmatprep.subr.mxu0 0.0
    %257 = vmatpush1.msra.mxu0 0.0
    %258 = vmatprep.subr.mxu0 0.0
    %259 = vmatpush1.msra.mxu0 0.0
    %260 = vmatprep.subr.mxu0 0.0
    %261 = vmatpush1.msra.mxu0 0.0
    %262 = vmatprep.subr.mxu0 0.0
    %263 = vmatpush1.msra.mxu0 0.0
    %264 = vmatprep.subr.mxu0 0.0
    %265 = vmatpush1.msra.mxu0 0.0
    %266 = vmatprep.subr.mxu0 0.0
    %267 = vmatpush1.msra.mxu0 0.0
    %268 = vmatprep.subr.mxu0 0.0
    %269 = vmatpush1.msra.mxu0 0.0
    %270 = vmatprep.subr.mxu0 0.0
    %271 = vmatpush1.msra.mxu0 0.0
    %272 = vmatprep.subr.mxu0 0.0
    %273 = vmatpush1.msra.mxu0 0.0
    %274 = vmatprep.subr.mxu0 0.0
    %275 = vmatpush1.msra.mxu0 0.0
    %276 = vmatprep.subr.mxu0 0.0
    %277 = vmatpush1.msra.mxu0 0.0
    %278 = vmatprep.subr.mxu0 0.0
    %279 = vmatpush1.msra.mxu0 0.0
    %280 = vmatprep.subr.mxu0 0.0
    %281 = vmatpush1.msra.mxu0 0.0
    %282 = vmatprep.mubr.f32.mxu0 0.0
    %283 = vmatmul.mubr.f32.gmra.mrb[0].mxu0 %v207
    %v284 = vpop.f32.mrb[0].mxu0
    %v285 = vadd.f32 %v188, %v284
    %v286 = vpop.f32.mrb[0].mxu0
    %v287 = vadd.f32 %v188, %v286
    %288 = vmatprep.mubr.f32.mxu0 0.0
    %289 = vmatmul.mubr.f32.gmra.mrb[0].mxu0 %v210
    %v290 = vpop.f32.mrb[0].mxu0
    %v291 = vadd.f32 %v193, %v290
    %v292 = vpop.f32.mrb[0].mxu0
    %v293 = vadd.f32 %v193, %v292
    %294 = vmatprep.mubr.f32.mxu0 0.0
    %295 = vmatmul.mubr.f32.gmra.mrb[0].mxu0 %v213
    %v296 = vpop.f32.mrb[0].mxu0
    %v297 = vadd.f32 %v198, %v296
    %v298 = vpop.f32.mrb[0].mxu0
    %v299 = vadd.f32 %v198, %v298
    %300 = vmatprep.mubr.f32.mxu0 0.0
    %301 = vmatmul.mubr.f32.gmra.mrb[0].mxu0 %v216
    %v302 = vpop.f32.mrb[0].mxu0
    %v303 = vadd.f32 %v203, %v302
    %v304 = vpop.f32.mrb[0].mxu0
    %v305 = vadd.f32 %v203, %v304
    %306 = vdwg.mxu0
    %v307 = vmax.f32 %v285, 0.0
    %v308 = vmax.f32 %v287, 0.0
    %v309 = vmax.f32 %v291, 0.0
    %v310 = vmax.f32 %v293, 0.0
    %v311 = vmax.f32 %v297, 0.0
    %v312 = vmax.f32 %v299, 0.0
    %v313 = vmax.f32 %v303, 0.0
    %v314 = vmax.f32 %v305, 0.0
    %v315 = vmul.f32 %v307, %v307
    %v316 = vmul.f32 %v308, %v308
    %v317 = vmul.f32 %v309, %v309
    %v318 = vmul.f32 %v310, %v310
    %v319 = vmul.f32 %v311, %v311
    %v320 = vmul.f32 %v312, %v312
    %v321 = vmul.f32 %v313, %v313
    %v322 = vmul.f32 %v314, %v314
    %v323 = vld [vmem:[%s3] sm:$0xff]
    %v324 = vld [vmem:[%s3 + $0x8] sm:$0xff]
    %v325 = vld [vmem:[%s3 + $0x10] sm:$0xff]
    %v326 = vld [vmem:[%s3 + $0x18] sm:$0xff]
    %v327 = vld [vmem:[%s3 + $0x20] sm:$0xff]
    %v328 = vld [vmem:[%s3 + $0x28] sm:$0xff]
    %v329 = vld [vmem:[%s3 + $0x30] sm:$0xff]
    %v330 = vld [vmem:[%s3 + $0x38] sm:$0xff]
    %v331 = vld [vmem:[%s3 + $0x40] sm:$0xff]
    %v332 = vld [vmem:[#allocation2] sm:$0x1]
    %334 = vset.pattern.permute.xlu0 0
    %335 = vperm.xlu0 %334, %v323
    %v336 = vpop.permute.xlu0 %335
    %339 = vset.pattern.permute.xlu0 0
    %340 = vperm.xlu0 %339, %v324
    %v341 = vpop.permute.xlu0 %340
    %344 = vset.pattern.permute.xlu0 0
    %345 = vperm.xlu0 %344, %v325
    %v346 = vpop.permute.xlu0 %345
    %349 = vset.pattern.permute.xlu0 0
    %350 = vperm.xlu0 %349, %v326
    %v351 = vpop.permute.xlu0 %350
    %354 = vset.pattern.permute.xlu0 0
    %355 = vperm.xlu0 %354, %v327
    %v356 = vpop.permute.xlu0 %355
    %359 = vset.pattern.permute.xlu0 0
    %360 = vperm.xlu0 %359, %v328
    %v361 = vpop.permute.xlu0 %360
    %364 = vset.pattern.permute.xlu0 0
    %365 = vperm.xlu0 %364, %v329
    %v366 = vpop.permute.xlu0 %365
    %369 = vset.pattern.permute.xlu0 0
    %370 = vperm.xlu0 %369, %v330
    %v371 = vpop.permute.xlu0 %370
    %374 = vset.pattern.permute.xlu0 0
    %375 = vperm.xlu0 %374, %v331
    %v376 = vpop.permute.xlu0 %375
    %v378 = vmul.f32 %v29, %v336
    %v379 = vmul.f32 %v30, %v336
    %v380 = vmul.f32 %v169, %v341
    %v381 = vmul.f32 %v170, %v341
    %v382 = vmul.f32 %v171, %v346
    %v383 = vmul.f32 %v172, %v346
    %v384 = vmul.f32 %v173, %v351
    %v385 = vmul.f32 %v174, %v351
    %v386 = vmul.f32 %v175, %v356
    %v387 = vmul.f32 %v176, %v356
    %v388 = vmul.f32 %v315, %v361
    %v389 = vmul.f32 %v316, %v361
    %v390 = vmul.f32 %v317, %v366
    %v391 = vmul.f32 %v318, %v366
    %v392 = vmul.f32 %v319, %v371
    %v393 = vmul.f32 %v320, %v371
    %v394 = vmul.f32 %v321, %v376
    %v395 = vmul.f32 %v322, %v376
    %v396 = vadd.f32 %v378, %v380
    %v397 = vadd.f32 %v396, %v382
    %v398 = vadd.f32 %v397, %v384
    %v399 = vadd.f32 %v398, %v386
    %v400 = vadd.f32 %v399, %v388
    %v401 = vadd.f32 %v400, %v390
    %v402 = vadd.f32 %v401, %v392
    %v403 = vadd.f32 %v402, %v394
    %v404 = vrot.slane %v403, 4
    %v405 = vadd.f32 %v403, %v404
    %v406 = vrot.slane %v405, 2
    %v407 = vadd.f32 %v405, %v406
    %v408 = vrot.slane %v407, 1
    %v409 = vadd.f32 %v407, %v408
    %v410 = vadd.f32 %v379, %v381
    %v411 = vadd.f32 %v410, %v383
    %v412 = vadd.f32 %v411, %v385
    %v413 = vadd.f32 %v412, %v387
    %v414 = vadd.f32 %v413, %v389
    %v415 = vadd.f32 %v414, %v391
    %v416 = vadd.f32 %v415, %v393
    %v417 = vadd.f32 %v416, %v395
    %v418 = vrot.slane %v417, 4
    %v419 = vadd.f32 %v417, %v418
    %v420 = vrot.slane %v419, 2
    %v421 = vadd.f32 %v419, %v420
    %v422 = vrot.slane %v421, 1
    %v423 = vadd.f32 %v421, %v422
    %425 = vset.pattern.permute.xlu0 0
    %426 = vperm.xlu0 %425, %v332
    %v427 = vpop.permute.xlu0 %426
    %v429 = vlaneseq
    %v430 = vshrl.u32 %v429, 7
    %v431 = vsub.s32 0, %v430
    %v432 = vrot.slane %v427, %v431
    %v433 = vadd.f32 %v409, %v432
    %v434 = vadd.f32 %v423, %v432
    %v437 = vcombine.low %v433, %v434
    %v439 = vunpack.c.l.s4 1966171168
    %v440 = vunpack.c.0.s8 %v439
    %v441 = vlaneseq
    %v442 = vshrl.u32 %v441, 7
    %v443 = vsub.s32 %v440, %v442
    %v444 = vrot.slane %v437, %v443
    %v446 = vunpack.c.l.s4 1966171168
    %v447 = vunpack.c.0.s8 %v446
    %v448 = vlaneseq
    %v449 = vshrl.u32 %v448, 7
    %v450 = vsub.s32 %v447, %v449
    %v451 = vrot.slane %v444, %v450
    %v453 = vlaneseq
    %vm454 = vcmp.ge.s32.totalorder %v453, 0
    %vm455 = vcmp.lt.s32.totalorder %v453, 256
    %vm456 = vmand %vm454, %vm455
    %457 = vst.msk [vmem:[#allocation3] sm:$0x3] %vm456, %v451
    // Predicated region
    $region30: #{tpu_custom_call.1} parent=1 // pred_check
      _
    $region31: #{tpu_custom_call.1} parent=1 // pred_check_branch
      %459 = sbr.rel (0) target = $region33
    $region32: #{tpu_custom_call.1} parent=1 // pred_region
      %s461 = ssub.s32 32, 32
      %462 = vsyncadd [#allocation4], %s461
      %s464 = sshll.u32 [#allocation3], 4
      %s465 = int_to_ptr.vmem [resolvable:$true] %s464
      %467 = dma.vmem_to_hbm [thread:$0]  %s465, 32, %s7, [#allocation4]
    $region33: #{tpu_custom_call.1} parent=1 // pred_fallthru
      _
    // Predicated region
    $region34: #{tpu_custom_call.1} parent=1 // pred_check
      _
    $region35: #{tpu_custom_call.1} parent=1 // pred_check_branch
      %469 = sbr.rel (0) target = $region37
    $region36: #{tpu_custom_call.1} parent=1 // pred_region
      %470 = dma.done [#allocation4], 32
    $region37: #{tpu_custom_call.1} parent=1 // pred_fallthru
      _
    %471 = vsyncpa [#allocation4], 1

</llo_original>
